<compile_context>
chip_gen: v5e
topology: v5e:2x2
jax: 0.10.0
libtpu: 0.0.40
codegen_flags: <defaults>
</compile_context>

<pallas_src>
import functools

import jax
import jax.numpy as jnp
from jax import lax
from jax.experimental import pallas as pl
from jax.experimental.pallas import tpu as pltpu

_LANES = 128          # TPU lane width
_MIN_GRID_STEPS = 4   # enough steps for DMA pipelining + v7x's two TensorCores


# ---------------------------------------------------------------------------
# Tile-size selection
# ---------------------------------------------------------------------------
def _sublane_pack(itemsize):
    """Native packed sublane tile: 8 rows f32, 16 bf16, 32 int8/fp8."""
    return 8 * max(1, 4 // max(1, int(itemsize)))


def _vmem_target_bytes():
    """Per-block byte target; in + out are double-buffered => ~4x in VMEM."""
    try:  # generation-aware: v7x has 64 MiB VMEM, v5e/v6e have 128 MiB
        if pltpu.get_tpu_info().vmem_capacity_bytes >= (96 << 20):
            return 4 << 20
    except Exception:
        pass
    return 2 << 20


def _largest_aligned_divisor(n, cap, align):
    """Largest divisor of n that is a multiple of `align` and <= cap, or None."""
    d = (min(n, cap) // align) * align
    while d >= align:
        if n % d == 0:
            return d
        d -= align
    return None


def _pick_tiles_3d(batch, ns, itemsize, target_bytes):
    """Tiles (bt, fts) for the (B, ns, 128) layout. bt is unconstrained; fts
    must be a multiple of 8 (or the full extent)."""
    spack = _sublane_pack(itemsize)
    row_bytes = _LANES * itemsize
    max_rows = max(1, target_bytes // row_bytes)
    fts = None
    for align in sorted({spack, 8}, reverse=True):
        fts = _largest_aligned_divisor(ns, max_rows, align)
        if fts is not None:
            break
    if fts is None:
        fts = ns  # full extent is always a legal block dim
    blk_row_bytes = fts * row_bytes
    cap_bt = max(1, target_bytes // blk_row_bytes)
    bt = 1
    d = min(batch, cap_bt)
    while d >= 1:
        if batch % d == 0:
            bt = d
            break
        d -= 1

    def _steps():
        return (batch // bt) * (ns // fts)

    # Prefer >= _MIN_GRID_STEPS grid steps: DMA/compute overlap + dual-TC use.
    while bt > 1 and _steps() < _MIN_GRID_STEPS:
        nb = bt - 1
        while nb > 1 and batch % nb != 0:
            nb -= 1
        bt = nb
    while _steps() < _MIN_GRID_STEPS and fts % 2 == 0 and (fts // 2) % 8 == 0:
        fts //= 2
    return bt, fts


def _pick_bt_2d(batch, feat, itemsize, target_bytes):
    """Batch tile for the flat (B, feat) fallback layout (bt is a sublane dim,
    so it must be a multiple of the packed sublane tile or equal to B)."""
    spack = _sublane_pack(itemsize)
    row_bytes = feat * itemsize
    cap = max(1, target_bytes // row_bytes)
    if batch <= cap:
        bt = batch
    else:
        bt = None
        for align in sorted({spack, 8}, reverse=True):
            bt = _largest_aligned_divisor(batch, cap, align)
            if bt is not None:
                break
        if bt is None:
            # TODO(synk): no sublane-aligned divisor of B fits the VMEM target;
            # one whole-batch block may exceed VMEM for very large rows.
            bt = batch
    while ((batch // bt) < _MIN_GRID_STEPS and bt % 2 == 0
           and (bt // 2) % spack == 0 and batch % (bt // 2) == 0):
        bt //= 2
    return bt


# ---------------------------------------------------------------------------
# In-kernel helpers
# ---------------------------------------------------------------------------
def _reverse_segments_pow2(x, seg):
    """Reverse every contiguous length-`seg` chunk along the last (lane) axis.

    `seg` must be a power of two dividing the axis length.  log2(seg)
    butterfly stages: out[j] = prev[j ^ k], i.e. prev[j - k] where bit k of j
    is set (roll by +k) and prev[j + k] where it is clear (roll by size - k).
    2 XLU rolls + 1 VPU select per stage; the select mask is a (1, ..., size)
    constant slab broadcast over the data.
    """
    if seg <= 1:
        return x
    axis = x.ndim - 1
    size = x.shape[axis]
    iota_shape = (1,) * (x.ndim - 1) + (size,)
    lane = lax.broadcasted_iota(jnp.int32, iota_shape, axis)
    out = x
    k = 1
    while k < seg:
        take_minus = (lane & k) != 0
        minus_k = pltpu.roll(out, k, axis)         # [j] <- out[j - k]
        plus_k = pltpu.roll(out, size - k, axis)   # [j] <- out[j + k]
        out = jnp.where(take_minus, minus_k, plus_k)
        k *= 2
    return out


def _floordiv_mod_const(n, d):
    """Exact (n // d, n % d) for non-negative int32 n and a small constant d,
    via f32 reciprocal + one-step fixup (no vector integer divide needed)."""
    q = (n.astype(jnp.float32) * (1.0 / d)).astype(jnp.int32)
    r = n - q * d
    neg = r < 0
    q = jnp.where(neg, q - 1, q)
    r = jnp.where(neg, r + d, r)
    big = r >= d
    q = jnp.where(big, q + 1, q)
    r = jnp.where(big, r - d, r)
    return q, r


def _decode_hw(f, height, width):
    """h_idx, w_idx from the flat C*H*W index (shift/mask for pow2 dims)."""
    if (width & (width - 1)) == 0:
        w_idx = f & (width - 1)
        fw = f >> (width.bit_length() - 1)
    else:
        fw, w_idx = _floordiv_mod_const(f, width)
    if (height & (height - 1)) == 0:
        h_idx = fw & (height - 1)
    else:
        _, h_idx = _floordiv_mod_const(fw, height)
    return h_idx, w_idx


def _grid_shift_kernel(trafo_ref, x_ref, y_ref, *, height, width, flip_in_kernel):
    # trafo_ref: SMEM int32[5] = [start_h, start_w, stop_h, stop_w, flip]
    # x_ref / y_ref: VMEM block, (bt, fts, 128) or (bt, feat), input dtype.
    x = x_ref[...]

    start_h = trafo_ref[0]
    start_w = trafo_ref[1]
    stop_h = trafo_ref[2]
    stop_w = trafo_ref[3]

    # Flat C*H*W index of every element, computed on a single-row (1, ...)
    # slab and broadcast across the batch rows only in the final select.
    if x.ndim == 3:
        _, fts, ls = x.shape
        shape1 = (1, fts, ls)
        sub = lax.broadcasted_iota(jnp.int32, shape1, 1)
        lane = lax.broadcasted_iota(jnp.int32, shape1, 2)
        f = pl.program_id(1) * (fts * ls) + sub * ls + lane
    else:
        _, ft = x.shape
        f = pl.program_id(1) * ft + lax.broadcasted_iota(jnp.int32, (1, ft), 1)

    h_idx, w_idx = _decode_hw(f, height, width)

    # Unsigned range trick: start <= idx < stop  <=>  (idx - start) <u (stop - start).
    span_h = jnp.maximum(stop_h - start_h, 0).astype(jnp.uint32)
    span_w = jnp.maximum(stop_w - start_w, 0).astype(jnp.uint32)
    keep = ((h_idx - start_h).astype(jnp.uint32) < span_h) & (
        (w_idx - start_w).astype(jnp.uint32) < span_w
    )
    zero = jnp.zeros((), x.dtype)

    if flip_in_kernel:
        flip = trafo_ref[4]

        @pl.when(flip == 0)
        def _():
            y_ref[...] = jnp.where(keep, x, zero)

        @pl.when(flip != 0)
        def _():
            y_ref[...] = jnp.where(keep, _reverse_segments_pow2(x, width), zero)
    else:
        # The horizontal flip (if any) was already applied in the wrapper.
        y_ref[...] = jnp.where(keep, x, zero)


# ---------------------------------------------------------------------------
# Host-side wrappers
# ---------------------------------------------------------------------------
def random_grid_shift_apply(x, trafo):
    """x: (B, C, H, W); trafo: int32[5] = [start_h, start_w, stop_h, stop_w, flip]."""
    B, C, H, W = x.shape
    feat = C * H * W
    itemsize = x.dtype.itemsize
    target = _vmem_target_bytes()

    pow2_w = W > 0 and (W & (W - 1)) == 0
    use_3d = feat % _LANES == 0
    # In-kernel flip needs every W segment fully inside the roll axis:
    # the 128-lane axis for the 3-D layout, the whole feat axis otherwise.
    flip_in_kernel = pow2_w and (W <= _LANES if use_3d else True)

    if not flip_in_kernel:
        # Non-power-of-two (or >128-wide) rows: do the flip once in the
        # wrapper (one extra HBM pass) instead of O(W) XLU rolls in-kernel.
        x = lax.cond(trafo[4] != 0,
                     lambda a: jnp.flip(a, axis=3),
                     lambda a: a,
                     x)

    if use_3d:
        ns = feat // _LANES
        x_v = x.reshape(B, ns, _LANES)           # free contiguous reshape
        bt, fts = _pick_tiles_3d(B, ns, itemsize, target)
        grid = (B // bt, ns // fts)
        block = (bt, fts, _LANES)
        index_map = lambda i, j, trafo_ref: (i, j, 0)
    else:
        x_v = x.reshape(B, feat)
        bt = _pick_bt_2d(B, feat, itemsize, target)
        grid = (B // bt, 1)
        block = (bt, feat)
        index_map = lambda i, j, trafo_ref: (i, j)

    kernel = functools.partial(
        _grid_shift_kernel, height=H, width=W, flip_in_kernel=flip_in_kernel)

    y_v = pl.pallas_call(
        kernel,
        out_shape=jax.ShapeDtypeStruct(x_v.shape, x.dtype),
        grid_spec=pltpu.PrefetchScalarGridSpec(
            num_scalar_prefetch=1,
            grid=grid,
            in_specs=[pl.BlockSpec(block, index_map)],
            out_specs=pl.BlockSpec(block, index_map),
        ),
        compiler_params=pltpu.CompilerParams(
            dimension_semantics=("parallel", "parallel"),
            vmem_limit_bytes=32 << 20,
        ),
        cost_estimate=pl.CostEstimate(
            flops=0, transcendentals=0,
            bytes_accessed=2 * B * feat * itemsize),
    )(trafo, x_v)
    return y_v.reshape(B, C, H, W)


def get_transformation(key, target_size, shift=8, fliplr=True):
    """JAX port of RandomGridShift.get_transformation -> int32[5] trafo."""
    kf, ks = jax.random.split(key)
    if fliplr:
        flip = jax.random.randint(kf, (1,), 0, 2, dtype=jnp.int32)
    else:
        flip = jnp.zeros((1,), jnp.int32)
    seed = jax.random.randint(ks, (2,), 0, shift, dtype=jnp.int32) - shift // 2
    start = jnp.clip(seed, 0, target_size)
    stop = jnp.clip(target_size + seed, 0, target_size)
    # trafo = [start_h, start_w, stop_h, stop_w, flip]
    return jnp.concatenate([start, stop, flip]).astype(jnp.int32)


def random_grid_shift(x, key, target_size, shift=8, fliplr=True):
    """Forward pass of RandomGridShift: draw a transformation, apply it."""
    trafo = get_transformation(key, target_size, shift=shift, fliplr=fliplr)
    return random_grid_shift_apply(x, trafo), trafo


def _reference(x, trafo):
    """Pure-JAX reference identical to the PyTorch forward."""
    start_h, start_w, stop_h, stop_w, flip = [int(v) for v in trafo]
    xin = jnp.flip(x, axis=3) if flip else x
    _, _, H, W = x.shape
    h_idx = jnp.arange(H)[:, None]
    w_idx = jnp.arange(W)[None, :]
    mask = ((h_idx >= start_h) & (h_idx < stop_h)
            & (w_idx >= start_w) & (w_idx < stop_w))
    return jnp.where(mask[None, None, :, :], xin, 0).astype(x.dtype)


if __name__ == "__main__":
    key = jax.random.PRNGKey(0)
    kx, kt, kx2 = jax.random.split(key, 3)

    # Primary path: (B, C*H*W/128, 128) layout, in-kernel lane-rotate flip.
    B, C, H, W = 2, 4, 16, 16
    x = jax.random.normal(kx, (B, C, H, W), dtype=jnp.float32)

    y, trafo = random_grid_shift(x, kt, target_size=H, shift=8, fliplr=True)
    y = jax.block_until_ready(y)
    assert y.shape == x.shape and y.dtype == x.dtype
    assert jnp.allclose(y, _reference(x, jax.device_get(trafo)),
                        atol=1e-6, rtol=1e-6)

    # Explicitly exercise both pl.when-gated kernel paths.
    for flip in (0, 1):
        tf = jnp.array([2, 3, 14, 13, flip], dtype=jnp.int32)
        yf = jax.block_until_ready(random_grid_shift_apply(x, tf))
        assert jnp.allclose(yf, _reference(x, jax.device_get(tf)),
                            atol=1e-6, rtol=1e-6), f"mismatch (flip={flip})"

    # Fallback path: non-power-of-two W (and feat % 128 != 0) -> flat layout,
    # wrapper-side flip, float-reciprocal h/w decode.
    x2 = jax.random.normal(kx2, (2, 3, 12, 12), dtype=jnp.float32)
    for flip in (0, 1):
        tf = jnp.array([1, 2, 11, 10, flip], dtype=jnp.int32)
        yf = jax.block_until_ready(random_grid_shift_apply(x2, tf))
        assert jnp.allclose(yf, _reference(x2, jax.device_get(tf)),
                            atol=1e-6, rtol=1e-6), f"fallback mismatch (flip={flip})"

    print("KERNEL_OK")
</pallas_src>

<mosaic_0001>
module attributes {stable_mosaic.version = 11 : i64} {
  func.func @_grid_shift_kernel(%arg0: i32, %arg1: i32, %arg2: memref<5xi32, #tpu.memory_space<smem>>, %arg3: memref<1x8x128xf32, #tpu.memory_space<vmem>>, %arg4: memref<1x8x128xf32, #tpu.memory_space<vmem>>) attributes {dimension_semantics = [#tpu.dimension_semantics<parallel>, #tpu.dimension_semantics<parallel>], iteration_bounds = array<i64: 2, 1>, scalar_prefetch = 1 : i64, scratch_operands = 0 : i64, tpu.core_type = #tpu.core_type<tc>, window_params = [{transform_indices = @transform_0, window_bounds = array<i64: 1, 8, 128>}, {transform_indices = @transform_1, window_bounds = array<i64: 1, 8, 128>}]} {
    %c0 = arith.constant 0 : index
    %c0_0 = arith.constant 0 : index
    %c0_1 = arith.constant 0 : index
    %0 = vector.load %arg3[%c0, %c0_0, %c0_1] : memref<1x8x128xf32, #tpu.memory_space<vmem>>, vector<1x8x128xf32>
    %c0_2 = arith.constant 0 : index
    %1 = memref.load %arg2[%c0_2] : memref<5xi32, #tpu.memory_space<smem>>
    %c1 = arith.constant 1 : index
    %2 = memref.load %arg2[%c1] : memref<5xi32, #tpu.memory_space<smem>>
    %c2 = arith.constant 2 : index
    %3 = memref.load %arg2[%c2] : memref<5xi32, #tpu.memory_space<smem>>
    %c3 = arith.constant 3 : index
    %4 = memref.load %arg2[%c3] : memref<5xi32, #tpu.memory_space<smem>>
    %5 = tpu.iota {dimensions = array<i32: 1>} : vector<1x8x128xi32>
    %6 = tpu.iota {dimensions = array<i32: 2>} : vector<1x8x128xi32>
    %c1024_i32 = arith.constant 1024 : i32
    %7 = arith.muli %arg1, %c1024_i32 : i32
    %c128_i32 = arith.constant 128 : i32
    %8 = vector.broadcast %c128_i32 : i32 to vector<1x8x128xi32>
    %9 = arith.muli %5, %8 : vector<1x8x128xi32>
    %10 = vector.broadcast %7 : i32 to vector<1x8x128xi32>
    %11 = arith.addi %10, %9 : vector<1x8x128xi32>
    %12 = arith.addi %11, %6 : vector<1x8x128xi32>
    %c15_i32 = arith.constant 15 : i32
    %13 = vector.broadcast %c15_i32 : i32 to vector<1x8x128xi32>
    %14 = arith.andi %12, %13 : vector<1x8x128xi32>
    %c4_i32 = arith.constant 4 : i32
    %15 = vector.broadcast %c4_i32 : i32 to vector<1x8x128xi32>
    %16 = arith.shrsi %12, %15 : vector<1x8x128xi32>
    %c15_i32_3 = arith.constant 15 : i32
    %17 = vector.broadcast %c15_i32_3 : i32 to vector<1x8x128xi32>
    %18 = arith.andi %16, %17 : vector<1x8x128xi32>
    %19 = arith.subi %3, %1 : i32
    %c0_i32 = arith.constant 0 : i32
    %20 = arith.maxsi %19, %c0_i32 : i32
    %21 = arith.subi %4, %2 : i32
    %c0_i32_4 = arith.constant 0 : i32
    %22 = arith.maxsi %21, %c0_i32_4 : i32
    %23 = vector.broadcast %1 : i32 to vector<1x8x128xi32>
    %24 = arith.subi %18, %23 : vector<1x8x128xi32>
    %25 = vector.broadcast %20 : i32 to vector<1x8x128xi32>
    %26 = arith.cmpi ult, %24, %25 : vector<1x8x128xi32>
    %27 = vector.broadcast %2 : i32 to vector<1x8x128xi32>
    %28 = arith.subi %14, %27 : vector<1x8x128xi32>
    %29 = vector.broadcast %22 : i32 to vector<1x8x128xi32>
    %30 = arith.cmpi ult, %28, %29 : vector<1x8x128xi32>
    %31 = arith.andi %26, %30 : vector<1x8x128xi1>
    %c4 = arith.constant 4 : index
    %32 = memref.load %arg2[%c4] : memref<5xi32, #tpu.memory_space<smem>>
    %c0_i32_5 = arith.constant 0 : i32
    %33 = arith.cmpi eq, %32, %c0_i32_5 : i32
    %34 = arith.extui %33 : i1 to i32
    %cst = arith.constant 0.000000e+00 : f32
    %c0_i32_6 = arith.constant 0 : i32
    %35 = arith.cmpi ne, %34, %c0_i32_6 : i32
    scf.if %35 {
      %39 = vector.broadcast %cst : f32 to vector<1x8x128xf32>
      %40 = arith.select %31, %0, %39 : vector<1x8x128xi1>, vector<1x8x128xf32>
      %c0_10 = arith.constant 0 : index
      %c0_11 = arith.constant 0 : index
      %c0_12 = arith.constant 0 : index
      %41 = vector.load %arg4[%c0_10, %c0_11, %c0_12] : memref<1x8x128xf32, #tpu.memory_space<vmem>>, vector<1x8x128xf32>
      tpu.vector_store %arg4[%c0_10, %c0_11, %c0_12], %40 {strides = array<i32>} : memref<1x8x128xf32, #tpu.memory_space<vmem>>, vector<1x8x128xf32>,
    } else {
    }
    %c0_i32_7 = arith.constant 0 : i32
    %36 = arith.cmpi ne, %32, %c0_i32_7 : i32
    %37 = arith.extui %36 : i1 to i32
    %cst_8 = arith.constant 0.000000e+00 : f32
    %c0_i32_9 = arith.constant 0 : i32
    %38 = arith.cmpi ne, %37, %c0_i32_9 : i32
    scf.if %38 {
      %39 = tpu.iota {dimensions = array<i32: 2>} : vector<1x1x128xi32>
      %c1_i32 = arith.constant 1 : i32
      %40 = vector.broadcast %c1_i32 : i32 to vector<1x1x128xi32>
      %41 = arith.andi %39, %40 : vector<1x1x128xi32>
      %c0_i32_10 = arith.constant 0 : i32
      %42 = vector.broadcast %c0_i32_10 : i32 to vector<1x1x128xi32>
      %43 = arith.cmpi ne, %41, %42 : vector<1x1x128xi32>
      %c1_i32_11 = arith.constant 1 : i32
      %44 = tpu.dynamic_rotate %0 by %c1_i32_11 dim 2 : vector<1x8x128xf32>, i32 -> vector<1x8x128xf32>
      %c127_i32 = arith.constant 127 : i32
      %45 = tpu.dynamic_rotate %0 by %c127_i32 dim 2 : vector<1x8x128xf32>, i32 -> vector<1x8x128xf32>
      %46 = vector.shape_cast %43 : vector<1x1x128xi1> to vector<1x1x128xi1>
      %47 = vector.broadcast %46 : vector<1x1x128xi1> to vector<1x8x128xi1>
      %48 = arith.select %47, %44, %45 : vector<1x8x128xi1>, vector<1x8x128xf32>
      %c2_i32 = arith.constant 2 : i32
      %49 = vector.broadcast %c2_i32 : i32 to vector<1x1x128xi32>
      %50 = arith.andi %39, %49 : vector<1x1x128xi32>
      %c0_i32_12 = arith.constant 0 : i32
      %51 = vector.broadcast %c0_i32_12 : i32 to vector<1x1x128xi32>
      %52 = arith.cmpi ne, %50, %51 : vector<1x1x128xi32>
      %c2_i32_13 = arith.constant 2 : i32
      %53 = tpu.dynamic_rotate %48 by %c2_i32_13 dim 2 : vector<1x8x128xf32>, i32 -> vector<1x8x128xf32>
      %c126_i32 = arith.constant 126 : i32
      %54 = tpu.dynamic_rotate %48 by %c126_i32 dim 2 : vector<1x8x128xf32>, i32 -> vector<1x8x128xf32>
      %55 = vector.shape_cast %52 : vector<1x1x128xi1> to vector<1x1x128xi1>
      %56 = vector.broadcast %55 : vector<1x1x128xi1> to vector<1x8x128xi1>
      %57 = arith.select %56, %53, %54 : vector<1x8x128xi1>, vector<1x8x128xf32>
      %c4_i32_14 = arith.constant 4 : i32
      %58 = vector.broadcast %c4_i32_14 : i32 to vector<1x1x128xi32>
      %59 = arith.andi %39, %58 : vector<1x1x128xi32>
      %c0_i32_15 = arith.constant 0 : i32
      %60 = vector.broadcast %c0_i32_15 : i32 to vector<1x1x128xi32>
      %61 = arith.cmpi ne, %59, %60 : vector<1x1x128xi32>
      %c4_i32_16 = arith.constant 4 : i32
      %62 = tpu.dynamic_rotate %57 by %c4_i32_16 dim 2 : vector<1x8x128xf32>, i32 -> vector<1x8x128xf32>
      %c124_i32 = arith.constant 124 : i32
      %63 = tpu.dynamic_rotate %57 by %c124_i32 dim 2 : vector<1x8x128xf32>, i32 -> vector<1x8x128xf32>
      %64 = vector.shape_cast %61 : vector<1x1x128xi1> to vector<1x1x128xi1>
      %65 = vector.broadcast %64 : vector<1x1x128xi1> to vector<1x8x128xi1>
      %66 = arith.select %65, %62, %63 : vector<1x8x128xi1>, vector<1x8x128xf32>
      %c8_i32 = arith.constant 8 : i32
      %67 = vector.broadcast %c8_i32 : i32 to vector<1x1x128xi32>
      %68 = arith.andi %39, %67 : vector<1x1x128xi32>
      %c0_i32_17 = arith.constant 0 : i32
      %69 = vector.broadcast %c0_i32_17 : i32 to vector<1x1x128xi32>
      %70 = arith.cmpi ne, %68, %69 : vector<1x1x128xi32>
      %c8_i32_18 = arith.constant 8 : i32
      %71 = tpu.dynamic_rotate %66 by %c8_i32_18 dim 2 : vector<1x8x128xf32>, i32 -> vector<1x8x128xf32>
      %c120_i32 = arith.constant 120 : i32
      %72 = tpu.dynamic_rotate %66 by %c120_i32 dim 2 : vector<1x8x128xf32>, i32 -> vector<1x8x128xf32>
      %73 = vector.shape_cast %70 : vector<1x1x128xi1> to vector<1x1x128xi1>
      %74 = vector.broadcast %73 : vector<1x1x128xi1> to vector<1x8x128xi1>
      %75 = arith.select %74, %71, %72 : vector<1x8x128xi1>, vector<1x8x128xf32>
      %76 = vector.broadcast %cst_8 : f32 to vector<1x8x128xf32>
      %77 = arith.select %31, %75, %76 : vector<1x8x128xi1>, vector<1x8x128xf32>
      %c0_19 = arith.constant 0 : index
      %c0_20 = arith.constant 0 : index
      %c0_21 = arith.constant 0 : index
      %78 = vector.load %arg4[%c0_19, %c0_20, %c0_21] : memref<1x8x128xf32, #tpu.memory_space<vmem>>, vector<1x8x128xf32>
      tpu.vector_store %arg4[%c0_19, %c0_20, %c0_21], %77 {strides = array<i32>} : memref<1x8x128xf32, #tpu.memory_space<vmem>>, vector<1x8x128xf32>,
    } else {
    }
    return
  }
  func.func @transform_0(%arg0: i32, %arg1: i32, %arg2: memref<5xi32, #tpu.memory_space<smem>>) -> (i32, i32, i32) {
    %c0_i32 = arith.constant 0 : i32
    %c0_i32_0 = arith.constant 0 : i32
    return %arg0, %arg1, %c0_i32 : i32, i32, i32
  }
  func.func @transform_1(%arg0: i32, %arg1: i32, %arg2: memref<5xi32, #tpu.memory_space<smem>>) -> (i32, i32, i32) {
    %c0_i32 = arith.constant 0 : i32
    %c0_i32_0 = arith.constant 0 : i32
    return %arg0, %arg1, %c0_i32 : i32, i32, i32
  }
}

</mosaic_0001>

<llo_original>
// kernel: tpu_custom_call.1
$region0: #{tpu_custom_call.1}
  #allocation0 [shape = 'u32[]', space=smem, size = 0x4, offset = 0x4, fixed_abs, tag = 'smem constant byte address 0x4 - core index']
  #allocation1 [shape = 'u32[72,128]{1,0:T(1,128)}', space=vmem, size = 0x9000, scoped, tag = 'internal scratch']
  #allocation2 [shape = 's32[1]{0}', space=sflag, size = 0x4, scoped, tag = 'scoped memory for tpu_custom_call.1']
  #allocation3 [shape = 'u8[512]{0}', space=smem, size = 0x200, scoped, tag = 'prefetched SMEM operand 0']
  %s0 = inlined_call_operand.hbm [shape: s32[5], index: 0, kind: input, shape index: {}]
  %s1 = inlined_call_operand.hbm [shape: f32[2,8,128], index: 1, kind: input, shape index: {}]
  %s2 = inlined_call_operand.hbm [shape: f32[2,8,128], index: 2, kind: output, shape index: {}]
  %s3 = sld [smem:[#allocation0]]
  $region49: #{tpu_custom_call.1} parent=0
    _
  %s5 = ssub.s32 1, %s3
  %s6 = scalar_select 0, %s5, %s3
  %s8 = sshll.u32 %s0, 4
  %s9 = int_to_ptr.hbm [resolvable:$true] %s8
  %11 = dma.hbm_to_smem %s9, 16, [#allocation3], [#allocation2]
  %13 = dma.done [#allocation2], 16
  %14 = sfence
  $region1: #{tpu_custom_call.1} parent=0
    #allocation4 [shape = 'u8[8192]{0}', space=vmem, size = 0x2000, scoped, tag = 'input window, operand 1']
    #allocation5 [shape = 's32[2]{0}', space=sflag, size = 0x8, scoped, tag = 'scoped memory for tpu_custom_call.1']
    #allocation6 [shape = 's32[2]{0}', space=sflag, size = 0x8, scoped, tag = 'scoped memory for tpu_custom_call.1']
    #allocation7 [shape = 'u8[8192]{0}', space=vmem, size = 0x2000, scoped, tag = 'output window, operand 0']
    %15 = vsyncpa [#allocation5], 0
    %s16 = scalar_lea.sflag [#allocation5], 1
    %17 = vsyncpa %s16, 0
    %18 = vsyncpa [#allocation6], 0
    %s19 = scalar_lea.sflag [#allocation6], 1
    %20 = vsyncpa %s19, 0
    loop: start=0, step=1, limit=4
    $region2: #{tpu_custom_call.1} parent=1 // loop_pre_header
      _
    $region3: #{tpu_custom_call.1} parent=1 // loop_header
      %s22 = sphi 0, %s26
      %p23 = scmp.ge.s32.totalorder %s22, 4
      %s29 = sphi 0, %s41
      %s30 = sphi 0, %s37
      %s31 = sphi 0, %s29
      %s32 = sphi 0, %s30
      %s33 = sphi 0, %s31
      %s34 = sphi 0, %s32
      %s46 = sphi 0, %s48
      %s49 = sphi 0, %s46
      %s50 = sphi 0, %s49
      %s66 = sphi 0, %s50
      %s74 = sphi 0, %s76
      %s77 = sphi 0, %s74
      %s78 = sphi 0, %s77
      %s94 = sphi 0, %s78
    $region4: #{tpu_custom_call.1} parent=1 // loop_header_branch
      %25 = sbr.rel (%p23) target = $region8
    $region5: #{tpu_custom_call.1} parent=1 // loop_body
      %s27 = ssub.s32 %s22, 1
      %s28 = ssub.s32 %s22, 2
      %s35 = sadd.s32 1, %s30
      %p36 = scmp.ge.s32.totalorder %s35, 1
      %s37 = scalar_select %p36, 0, %s35
      %s38 = sadd.s32 1, %s29
      %s39 = scalar_select %p36, %s38, %s29
      %p40 = scmp.ge.s32.totalorder %s39, 2
      %s41 = scalar_select %p40, 0, %s39
      %s42 = ssub.s32 %s29, %s41
      %s43 = ssub.s32 %s30, %s37
      %s44 = sor.u32 %s42, %s43
      %p45 = scmp.eq.s32.totalorder %s44, 0
      %s47 = sadd.s32 %s46, 1
      %s48 = scalar_select %p45, %s46, %s47
      %p51 = pneg %p45
      %p52 = scmp.eq.s32.totalorder %s22, 1
      %p53 = por %p51, %p52
      %p54 = scmp.ne.s32.totalorder %s46, %s49
      %p55 = scmp.eq.s32.totalorder %s22, 0
      %p56 = por %p54, %p55
      %p57 = scmp.ne.s32.totalorder %s46, %s49
      %p58 = scmp.eq.s32.totalorder %s27, 1
      %p59 = por %p57, %p58
      %p60 = scmp.ne.s32.totalorder %s49, %s50
      %p61 = scmp.eq.s32.totalorder %s27, 0
      %p62 = por %p60, %p61
      %p63 = scmp.ne.s32.totalorder %s49, %s50
      %p64 = scmp.eq.s32.totalorder %s28, 1
      %p65 = por %p63, %p64
      %p67 = scmp.ne.s32.totalorder %s50, %s66
      %p68 = scmp.eq.s32.totalorder %s28, 0
      %p69 = por %p67, %p68
      %s70 = ssub.s32 %s29, %s41
      %s71 = ssub.s32 %s30, %s37
      %s72 = sor.u32 %s70, %s71
      %p73 = scmp.eq.s32.totalorder %s72, 0
      %s75 = sadd.s32 %s74, 1
      %s76 = scalar_select %p73, %s74, %s75
      %p79 = pneg %p73
      %p80 = scmp.eq.s32.totalorder %s22, 1
      %p81 = por %p79, %p80
      %p82 = scmp.ne.s32.totalorder %s74, %s77
      %p83 = scmp.eq.s32.totalorder %s22, 0
      %p84 = por %p82, %p83
      %p85 = scmp.ne.s32.totalorder %s74, %s77
      %p86 = scmp.eq.s32.totalorder %s27, 1
      %p87 = por %p85, %p86
      %p88 = scmp.ne.s32.totalorder %s77, %s78
      %p89 = scmp.eq.s32.totalorder %s27, 0
      %p90 = por %p88, %p89
      %p91 = scmp.ne.s32.totalorder %s77, %s78
      %p92 = scmp.eq.s32.totalorder %s28, 1
      %p93 = por %p91, %p92
      %p95 = scmp.ne.s32.totalorder %s78, %s94
      %p96 = scmp.eq.s32.totalorder %s28, 0
      %p97 = por %p95, %p96
      %p98 = scmp.le.s32.totalorder 1, %s22
      %p99 = scmp.lt.s32.totalorder %s22, 3
      %p100 = pnand %p98, %p99
      %p101 = pneg %p100
      // Predicated region
      $region9: #{tpu_custom_call.1} parent=5 // pred_check
        _
      $region10: #{tpu_custom_call.1} parent=5 // pred_check_branch
        %103 = sbr.rel (%p100) target = $region12
      $region11: #{tpu_custom_call.1} parent=5 // pred_region
        %s104 = ssub.s32 %s22, 1
      $region12: #{tpu_custom_call.1} parent=5 // pred_fallthru
        _
      %p105 = scmp.lt.s32.totalorder %s22, 2
      // Predicated region
      $region13: #{tpu_custom_call.1} parent=5 // pred_check
        %p106 = pneg %p105
      $region14: #{tpu_custom_call.1} parent=5 // pred_check_branch
        %108 = sbr.rel (%p106) target = $region16
      $region15: #{tpu_custom_call.1} parent=5 // pred_region
        // Predicated region
        $region17: #{tpu_custom_call.1} parent=15 // pred_check
          %p109 = pneg %p56
        $region18: #{tpu_custom_call.1} parent=15 // pred_check_branch
          %111 = sbr.rel (%p109) target = $region20
        $region19: #{tpu_custom_call.1} parent=15 // pred_region
          %s112 = sand.u32 %s46, 1
          %s113 = scalar_lea.sflag [#allocation5], %s112
          %s114 = sand.u32 %s46, 1
          %s115 = smul.addr %s114, 8
          %s116 = scalar_lea.vmem [#allocation4], %s115
          %118 = vsyncadd %s113, 0
          %s119 = sadd.s32 %s30, %s29
          %s120 = smul.addr %s119, 8
          %s121 = scalar_lea.hbm %s1, %s120
          %s123 = sshll.u32 %s121, 4
          %s124 = int_to_ptr.hbm [resolvable:$true] %s123
          %s125 = sshll.u32 %s116, 4
          %s126 = int_to_ptr.vmem [resolvable:$true] %s125
          %128 = dma.hbm_to_vmem [thread:$0]  %s124, 128, %s126, %s113
        $region20: #{tpu_custom_call.1} parent=15 // pred_fallthru
          _
      $region16: #{tpu_custom_call.1} parent=5 // pred_fallthru
        _
      %p129 = scmp.le.s32.totalorder 1, %s22
      %p130 = scmp.lt.s32.totalorder %s22, 3
      %p131 = pnand %p129, %p130
      %p132 = pneg %p131
      // Predicated region
      $region21: #{tpu_custom_call.1} parent=5 // pred_check
        _
      $region22: #{tpu_custom_call.1} parent=5 // pred_check_branch
        %134 = sbr.rel (%p131) target = $region24
      $region23: #{tpu_custom_call.1} parent=5 // pred_region
        %s135 = ssub.s32 %s22, 1
        %s136 = sand.u32 %s49, 1
        %s137 = scalar_lea.sflag [#allocation5], %s136
        %s138 = sand.u32 %s49, 1
        %s139 = smul.addr %s138, 8
        %s140 = scalar_lea.vmem [#allocation4], %s139
        // Predicated region
        $region25: #{tpu_custom_call.1} parent=23 // pred_check
          %p141 = pneg %p62
        $region26: #{tpu_custom_call.1} parent=23 // pred_check_branch
          %143 = sbr.rel (%p141) target = $region28
        $region27: #{tpu_custom_call.1} parent=23 // pred_region
          %145 = dma.done %s137, 128
        $region28: #{tpu_custom_call.1} parent=23 // pred_fallthru
          _
        %s146 = sand.u32 %s49, 1
        %s147 = scalar_lea.sflag [#allocation5], %s146
        %s148 = sand.u32 %s49, 1
        %s149 = smul.addr %s148, 8
        %s150 = scalar_lea.vmem [#allocation4], %s149
        %p151 = pneg %p62
        %p152 = pneg %p59
        %p153 = pneg %p90
        %p154 = pneg %p87
        %s155 = sand.u32 %s77, 1
        %s156 = scalar_lea.sflag [#allocation6], %s155
        %s157 = sand.u32 %s77, 1
        %s158 = smul.addr %s157, 8
        %s159 = scalar_lea.vmem [#allocation7], %s158
        %v160 = vld [vmem:[%s140] sm:$0xff]
        %s161 = sld [smem:[#allocation3]]
        %s162 = sld [smem:[#allocation3 + $0x1]]
        %s163 = sld [smem:[#allocation3 + $0x2]]
        %s164 = sld [smem:[#allocation3 + $0x3]]
        %v165 = vlaneseq
        %v166 = vshrl.u32 %v165, 7
        %v167 = vlaneseq
        %v168 = vand.u32 %v167, 127
        %s169 = smul.u32 %s32, 1024
        %v170 = vmul.u32 %v166, 128
        %v171 = vstv %s169
        %v172 = vadd.s32 %v171, %v170
        %v173 = vadd.s32 %v172, %v168
        %v174 = vand.u32 %v173, 15
        %v175 = vshra.s32 %v173, 4
        %v176 = vand.u32 %v175, 15
        %s177 = ssub.s32 %s163, %s161
        %p178 = scmp.gt.s32.totalorder %s177, 0
        %s179 = scalar_select %p178, %s177, 0
        %s180 = ssub.s32 %s164, %s162
        %p181 = scmp.gt.s32.totalorder %s180, 0
        %s182 = scalar_select %p181, %s180, 0
        %v183 = vstv %s161
        %v184 = vsub.s32 %v176, %v183
        %v185 = vstv %s179
        %v186 = vadd.s32 %v184, 2147483648
        %v187 = vadd.s32 %v185, 2147483648
        %vm188 = vcmp.lt.s32.totalorder %v186, %v187
        %v189 = vstv %s162
        %v190 = vsub.s32 %v174, %v189
        %v191 = vstv %s182
        %v192 = vadd.s32 %v190, 2147483648
        %v193 = vadd.s32 %v191, 2147483648
        %vm194 = vcmp.lt.s32.totalorder %v192, %v193
        %vm195 = vmand %vm188, %vm194
        %s196 = sld [smem:[#allocation3 + $0x4]]
        %p197 = scmp.eq.s32.totalorder %s196, 0
        // Predicated region
        $region29: #{tpu_custom_call.1} parent=23 // pred_check
          %p198 = pneg %p197
        $region30: #{tpu_custom_call.1} parent=23 // pred_check_branch
          %200 = sbr.rel (%p198) target = $region32
        $region31: #{tpu_custom_call.1} parent=23 // pred_region
          %v201 = vsel %vm195, %v160, 0.0
          %202 = vst [vmem:[%s159] sm:$0xff] %v201
        $region32: #{tpu_custom_call.1} parent=23 // pred_fallthru
          _
        %p203 = scmp.ne.s32.totalorder %s196, 0
        // Predicated region
        $region33: #{tpu_custom_call.1} parent=23 // pred_check
          %p204 = pneg %p203
        $region34: #{tpu_custom_call.1} parent=23 // pred_check_branch
          %206 = sbr.rel (%p204) target = $region36
        $region35: #{tpu_custom_call.1} parent=23 // pred_region
          %v207 = vand.u32 %v168, 1
          %vm208 = vcmp.ne.s32.totalorder %v207, 0
          %209 = vrot.lane.b32.xlu0 %v160, 1
          %v210 = vpop.permute.xlu0 %209
          %211 = vrot.lane.b32.xlu0 %v160, 127
          %v212 = vpop.permute.xlu0 %211
          %v213 = vsel %vm208, 1, 0
          %vm214 = vcmp.eq.s32.totalorder %v213, 1
          %v215 = vsel %vm214, %v210, %v212
          %v216 = vand.u32 %v168, 2
          %vm217 = vcmp.ne.s32.totalorder %v216, 0
          %218 = vrot.lane.b32.xlu0 %v215, 2
          %v219 = vpop.permute.xlu0 %218
          %220 = vrot.lane.b32.xlu0 %v215, 126
          %v221 = vpop.permute.xlu0 %220
          %v222 = vsel %vm217, 1, 0
          %vm223 = vcmp.eq.s32.totalorder %v222, 1
          %v224 = vsel %vm223, %v219, %v221
          %v225 = vand.u32 %v168, 4
          %vm226 = vcmp.ne.s32.totalorder %v225, 0
          %227 = vrot.lane.b32.xlu0 %v224, 4
          %v228 = vpop.permute.xlu0 %227
          %229 = vrot.lane.b32.xlu0 %v224, 124
          %v230 = vpop.permute.xlu0 %229
          %v231 = vsel %vm226, 1, 0
          %vm232 = vcmp.eq.s32.totalorder %v231, 1
          %v233 = vsel %vm232, %v228, %v230
          %v234 = vand.u32 %v168, 8
          %vm235 = vcmp.ne.s32.totalorder %v234, 0
          %236 = vrot.lane.b32.xlu0 %v233, 8
          %v237 = vpop.permute.xlu0 %236
          %238 = vrot.lane.b32.xlu0 %v233, 120
          %v239 = vpop.permute.xlu0 %238
          %v240 = vsel %vm235, 1, 0
          %vm241 = vcmp.eq.s32.totalorder %v240, 1
          %v242 = vsel %vm241, %v237, %v239
          %v243 = vsel %vm195, %v242, 0.0
          %244 = vst [vmem:[%s159] sm:$0xff] %v243
        $region36: #{tpu_custom_call.1} parent=23 // pred_fallthru
          _
        %s245 = sand.u32 %s77, 1
        %s246 = scalar_lea.sflag [#allocation6], %s245
        %s247 = sand.u32 %s77, 1
        %s248 = smul.addr %s247, 8
        %s249 = scalar_lea.vmem [#allocation7], %s248
        // Predicated region
        $region37: #{tpu_custom_call.1} parent=23 // pred_check
          %p250 = pneg %p87
        $region38: #{tpu_custom_call.1} parent=23 // pred_check_branch
          %252 = sbr.rel (%p250) target = $region40
        $region39: #{tpu_custom_call.1} parent=23 // pred_region
          %254 = vsyncadd %s246, 0
          %s255 = sadd.s32 %s32, %s31
          %s256 = smul.addr %s255, 8
          %s257 = scalar_lea.hbm %s2, %s256
          %s259 = sshll.u32 %s249, 4
          %s260 = int_to_ptr.vmem [resolvable:$true] %s259
          %s261 = sshll.u32 %s257, 4
          %s262 = int_to_ptr.hbm [resolvable:$true] %s261
          %264 = dma.vmem_to_hbm [thread:$0]  %s260, 128, %s262, %s246
        $region40: #{tpu_custom_call.1} parent=23 // pred_fallthru
          _
      $region24: #{tpu_custom_call.1} parent=5 // pred_fallthru
        _
      %p265 = scmp.le.s32.totalorder 2, %s22
      // Predicated region
      $region41: #{tpu_custom_call.1} parent=5 // pred_check
        %p266 = pneg %p265
      $region42: #{tpu_custom_call.1} parent=5 // pred_check_branch
        %268 = sbr.rel (%p266) target = $region44
      $region43: #{tpu_custom_call.1} parent=5 // pred_region
        %s269 = ssub.s32 %s22, 2
        // Predicated region
        $region45: #{tpu_custom_call.1} parent=43 // pred_check
          %p270 = pneg %p93
        $region46: #{tpu_custom_call.1} parent=43 // pred_check_branch
          %272 = sbr.rel (%p270) target = $region48
        $region47: #{tpu_custom_call.1} parent=43 // pred_region
          %s273 = sand.u32 %s78, 1
          %s274 = scalar_lea.sflag [#allocation6], %s273
          %s275 = sand.u32 %s78, 1
          %s276 = smul.addr %s275, 8
          %s277 = scalar_lea.vmem [#allocation7], %s276
          %279 = dma.done %s274, 128
        $region48: #{tpu_custom_call.1} parent=43 // pred_fallthru
          _
      $region44: #{tpu_custom_call.1} parent=5 // pred_fallthru
        _
    $region6: #{tpu_custom_call.1} parent=1 // loop_footer
      %s26 = sadd.s32 1, %s22
    $region7: #{tpu_custom_call.1} parent=1 // loop_footer_branch
      %21 = sbr.rel target = $region3
    $region8: #{tpu_custom_call.1} parent=1 // loop_exit
      _
    %280 = vsyncpa [#allocation5], 1
    %s281 = scalar_lea.sflag [#allocation5], 1
    %282 = vsyncpa %s281, 1
    %283 = vsyncpa [#allocation6], 1
    %s284 = scalar_lea.sflag [#allocation6], 1
    %285 = vsyncpa %s284, 1

</llo_original>
